<compile_context>
chip_gen: v6e
topology: v6e:2x2x1
jax: 0.10.0
libtpu: 0.0.40
codegen_flags: <defaults>
</compile_context>

<pallas_src>
import jax
import jax.numpy as jnp
from jax.experimental import pallas as pl
from jax.experimental.pallas import tpu as pltpu


# ----------------------------------------------------------------------------
# Small helpers
# ----------------------------------------------------------------------------
def _round_up(x, m):
    return -(-x // m) * m


def _cdiv(a, b):
    return -(-a // b)


def _vmem_capacity_bytes():
    """Physical VMEM of the local TPU generation (64 MiB on v7x, 128 MiB on
    v5e/v6e); conservative 64 MiB fallback if it cannot be determined."""
    try:
        cap = int(pltpu.get_tpu_info().vmem_capacity_bytes)
        if cap > 0:
            return cap
    except Exception:
        pass
    try:
        kind = jax.devices()[0].device_kind.lower()
        if "v7" in kind:
            return 64 << 20
        if "v5" in kind or "v6" in kind:
            return 128 << 20
    except Exception:
        pass
    return 64 << 20


def _pick_tile(dim, target, unit):
    """Tile for one dimension.  The caller pads the dim up to a multiple of the
    returned tile, so large awkward dims never fall back to a single giant
    full-dim block (review fix): dims <= unit use the full dim, dims <= target
    become one unit-aligned block, larger dims get a bounded <=target tile."""
    if dim <= unit:
        return dim
    if dim <= target:
        return _round_up(dim, unit)
    nb = _cdiv(_round_up(dim, unit), target)          # number of blocks
    return _round_up(_cdiv(dim, nb), unit)            # <= target (target % unit == 0)


def _fused_vmem_bytes(tm, tn, tk, lhs_bytes, rhs_bytes, res_bytes, out_bytes):
    """Double-buffered working set of the fused kernel + f32 accumulator."""
    return (
        2 * (tm * tk * lhs_bytes       # x panel
             + tk * tn * rhs_bytes     # weight panel
             + tn * 4                  # bias row (f32)
             + tm * tn * res_bytes     # residual tile
             + tm * tn * out_bytes)    # output tile
        + tm * tn * 4                  # accumulator scratch
    )


# ----------------------------------------------------------------------------
# Fused path: residual add folded into a Linear sublayer's matmul epilogue.
#   out = x @ w + b + x      (requires w square: out dim == in dim)
# ----------------------------------------------------------------------------
def _fused_linear_residual_kernel(x_ref, w_ref, b_ref, r_ref, o_ref, acc_ref):
    k = pl.program_id(2)

    @pl.when(k == 0)
    def _():
        # Initialize the accumulator with residual + bias: moves two (tm, tn)
        # VPU adds off the epilogue (which sits right in front of the output
        # writeback) into the k==0 step, which has VPU slack.  Summation-order
        # change vs. "add at the end" is within f32 accumulation noise.
        acc_ref[...] = (r_ref[...] + b_ref[...]).astype(jnp.float32)

    acc_ref[...] += jnp.dot(
        x_ref[...], w_ref[...], preferred_element_type=jnp.float32
    )

    @pl.when(k == pl.num_programs(2) - 1)
    def _():
        # Epilogue: just cast + single HBM write of the final result.
        o_ref[...] = acc_ref[...].astype(o_ref.dtype)


def fused_linear_residual(x, w, b, *, tm_target=512, tn_target=512,
                          tk_target=1024, mxu_dtype=jnp.bfloat16):
    """Pallas kernel computing `linear(x) + x` with the residual fused into the
    matmul epilogue (no extra HBM round trip for sublayer(x)).

    Precision contract: matmul operands are deliberately cast to `mxu_dtype`
    (bf16 by default — the MXU's native high-throughput input type) with f32
    accumulation; bias, residual and all epilogue math stay in f32.
    Pass mxu_dtype=None to keep the operands' own dtype on the MXU.
    """
    orig_shape = x.shape
    H = orig_shape[-1]
    x2 = x.reshape(-1, H)
    M, K = x2.shape
    Kw, N = w.shape
    assert K == Kw and N == K, "residual requires out_dim == in_dim"

    out_dtype = x.dtype
    if mxu_dtype is not None and x2.dtype == jnp.float32:
        lhs = x2.astype(mxu_dtype)
        rhs = w.astype(mxu_dtype)
    else:
        lhs, rhs = x2, w

    lhs_b = jnp.dtype(lhs.dtype).itemsize
    rhs_b = jnp.dtype(rhs.dtype).itemsize
    res_b = jnp.dtype(x2.dtype).itemsize
    out_b = jnp.dtype(out_dtype).itemsize

    # --- tile selection (128-lane aligned; the 512/1024 targets are 256-aligned
    # for big dims, which keeps the v6e/v7x MXU full) ------------------------
    tmt, tnt, tkt = tm_target, tn_target, tk_target
    tm = _pick_tile(M, tmt, 8)
    tn = _pick_tile(N, tnt, 128)
    tk = _pick_tile(K, tkt, 128)

    vmem_cap = _vmem_capacity_bytes()
    budget = int(vmem_cap * 0.6)          # leave headroom for compiler scratch
    while _fused_vmem_bytes(tm, tn, tk, lhs_b, rhs_b, res_b, out_b) > budget:
        if tkt > 256:
            tkt //= 2
            tk = _pick_tile(K, tkt, 128)
        elif tnt > 256:
            tnt //= 2
            tn = _pick_tile(N, tnt, 128)
        elif tmt > 64:
            tmt //= 2
            tm = _pick_tile(M, tmt, 8)
        else:
            break

    # Keep both TensorCores busy on dual-core parts (v7x): make sure the
    # product of the two "parallel" grid axes is >= 2 when M allows it.
    if _cdiv(M, tm) * _cdiv(N, tn) < 2 and M > 8:
        tm = _round_up(max(8, _cdiv(M, 2)), 8)

    Mp, Kp, Np = _round_up(M, tm), _round_up(K, tk), _round_up(N, tn)

    if (Mp, Kp) != (M, K):
        lhs = jnp.pad(lhs, ((0, Mp - M), (0, Kp - K)))     # zero-pad K: exact
    if (Kp, Np) != (K, N):
        rhs = jnp.pad(rhs, ((0, Kp - K), (0, Np - N)))
    res = x2
    if (Mp, Np) != (M, N):
        res = jnp.pad(res, ((0, Mp - M), (0, Np - N)))
    b2 = b.reshape(1, N)
    if Np != N:
        b2 = jnp.pad(b2, ((0, 0), (0, Np - N)))

    vmem_limit = min(
        max(_fused_vmem_bytes(tm, tn, tk, lhs_b, rhs_b, res_b, out_b) + (4 << 20),
            32 << 20),
        int(vmem_cap * 0.75),
    )

    out = pl.pallas_call(
        _fused_linear_residual_kernel,
        out_shape=jax.ShapeDtypeStruct((Mp, Np), out_dtype),
        grid=(Mp // tm, Np // tn, Kp // tk),
        in_specs=[
            pl.BlockSpec((tm, tk), lambda i, j, k: (i, k)),   # lhs x (mxu dtype)
            pl.BlockSpec((tk, tn), lambda i, j, k: (k, j)),   # weight (mxu dtype)
            pl.BlockSpec((1, tn), lambda i, j, k: (0, j)),    # bias (f32)
            pl.BlockSpec((tm, tn), lambda i, j, k: (i, j)),   # residual (f32)
        ],
        out_specs=pl.BlockSpec((tm, tn), lambda i, j, k: (i, j)),
        scratch_shapes=[pltpu.VMEM((tm, tn), jnp.float32)],
        compiler_params=pltpu.CompilerParams(
            dimension_semantics=("parallel", "parallel", "arbitrary"),
            vmem_limit_bytes=vmem_limit,
        ),
    )(lhs, rhs, b2, res)

    if (Mp, Np) != (M, N):
        out = out[:M, :N]
    return out.reshape(orig_shape)


# ----------------------------------------------------------------------------
# Generic path: arbitrary sublayer evaluated in plain JAX, residual add done
# in a lane-dense, large-tile Pallas kernel.
# ----------------------------------------------------------------------------
def _residual_add_kernel(y_ref, x_ref, o_ref):
    # Elementwise residual add on the VPU: out = sublayer(x) + x
    o_ref[...] = y_ref[...] + x_ref[...]


def _lane_dense_residual_add(y, x, *, target_block_bytes=None):
    assert y.shape == x.shape and y.dtype == x.dtype
    orig_shape = x.shape
    n = x.size
    itemsize = jnp.dtype(x.dtype).itemsize

    vmem_cap = _vmem_capacity_bytes()
    if target_block_bytes is None:
        # ~8 MiB blocks on 128 MiB-VMEM parts (v5e/v6e), ~6 MiB on v7x (64 MiB):
        # on the 85% HBM-roofline plateau while 6 double-buffered blocks still
        # leave ample headroom.
        target_block_bytes = (8 << 20) if vmem_cap >= (96 << 20) else (6 << 20)

    H = orig_shape[-1] if x.ndim >= 1 else n
    if x.ndim >= 2 and H % 128 == 0:
        # Fast path (typical transformer case): already lane-dense, zero copies.
        lane = H
        y2 = y.reshape(-1, lane)
        x2 = x.reshape(-1, lane)
        rows = y2.shape[0]
    else:
        # Fallback: flatten and pad once so the last dim is a wide multiple of
        # 128 lanes (full-width vst stores instead of masked partial stores).
        lane = min(1024, (n // 128) * 128) if n >= 128 else n
        rows = _cdiv(n, lane)
        pad = rows * lane - n
        yf = y.reshape(-1)
        xf = x.reshape(-1)
        if pad:
            yf = jnp.pad(yf, (0, pad))
            xf = jnp.pad(xf, (0, pad))
        y2 = yf.reshape(rows, lane)
        x2 = xf.reshape(rows, lane)

    # Row tile: biggest tile within the per-block byte budget.
    rows_per_block = max(8, (target_block_bytes // (lane * itemsize) // 8) * 8)
    if rows <= rows_per_block:
        rt = rows                       # single full-extent block
        grid = (1,)
    else:
        rt = rows_per_block             # ragged tail handled by a boundary block
        grid = (_cdiv(rows, rt),)

    block_bytes = rt * lane * itemsize
    # 2 inputs + 1 output, each double-buffered -> ~6 blocks + headroom,
    # clamped against the actual VMEM capacity of this generation.
    vmem_limit = min(max(6 * block_bytes + (2 << 20), 32 << 20),
                     int(vmem_cap * 0.75))

    out = pl.pallas_call(
        _residual_add_kernel,
        out_shape=jax.ShapeDtypeStruct((rows, lane), x.dtype),
        grid=grid,
        in_specs=[
            pl.BlockSpec((rt, lane), lambda i: (i, 0)),  # sublayer(x)
            pl.BlockSpec((rt, lane), lambda i: (i, 0)),  # x (residual)
        ],
        out_specs=pl.BlockSpec((rt, lane), lambda i: (i, 0)),
        compiler_params=pltpu.CompilerParams(
            dimension_semantics=("parallel",),
            vmem_limit_bytes=vmem_limit,
        ),
        input_output_aliases={0: 0},  # write result in place over y's buffer
    )(y2, x2)
    return out.reshape(-1)[:n].reshape(orig_shape)


def residual_connection(x, sublayer, *, use_pallas_add=True):
    """Pallas-backed equivalent of ResidualConnection.forward(x, sublayer).

    The sublayer runs as plain-JAX glue.  The Pallas lane-dense add is most
    useful when sublayer(x) is already materialized in HBM (e.g. it is itself a
    Pallas kernel); for purely XLA-fusible sublayers, pass use_pallas_add=False
    to let XLA fuse `+ x` and avoid the extra HBM round trip of sublayer(x).
    """
    # TODO(synk): arbitrary sublayer callables cannot be fused into the Pallas
    # kernel; only the Linear case has a fused epilogue (fused_linear_residual).
    y = sublayer(x)
    if not use_pallas_add:
        return y + x
    return _lane_dense_residual_add(y, x)


if __name__ == "__main__":
    # Small deterministic setup: x of shape [batch=2, seq=8, hidden=32]
    B, S, H = 2, 8, 32
    key = jax.random.PRNGKey(0)
    kx, kw, kb = jax.random.split(key, 3)

    x = jax.random.normal(kx, (B, S, H), dtype=jnp.float32)

    # Deterministic example sublayer (a simple Linear layer), params built in-script.
    w = jax.random.normal(kw, (H, H), dtype=jnp.float32) * 0.05
    b = jax.random.normal(kb, (H,), dtype=jnp.float32) * 0.05

    def sublayer(inp):
        return jnp.dot(inp, w) + b

    # ---- Path 1: fused residual-into-matmul-epilogue kernel (Linear sublayer).
    # Precision contract is explicit (bf16 MXU operands, f32 accumulation), so
    # compare against a precision-matched reference with a tight tolerance.
    fused_fn = jax.jit(lambda xx: fused_linear_residual(xx, w, b))
    out_fused = jax.block_until_ready(fused_fn(x))
    ref_fused = (
        jnp.dot(x.astype(jnp.bfloat16), w.astype(jnp.bfloat16),
                preferred_element_type=jnp.float32)
        + b + x
    )
    assert out_fused.shape == ref_fused.shape
    assert jnp.allclose(out_fused, ref_fused, atol=2e-3, rtol=2e-3)

    # ---- Path 2: generic residual connection with an arbitrary sublayer callable.
    ref = sublayer(x) + x
    generic_fn = jax.jit(lambda xx: residual_connection(xx, sublayer))
    out_generic = jax.block_until_ready(generic_fn(x))
    assert out_generic.shape == ref.shape
    assert jnp.allclose(out_generic, ref, atol=1e-4, rtol=1e-4)

    print("KERNEL_OK")
</pallas_src>

<mosaic_0001>
module attributes {stable_mosaic.version = 11 : i64} {
  func.func @_fused_linear_residual_kernel(%arg0: i32, %arg1: i32, %arg2: i32, %arg3: memref<8x32xbf16, #tpu.memory_space<vmem>>, %arg4: memref<32x32xbf16, #tpu.memory_space<vmem>>, %arg5: memref<1x32xf32, #tpu.memory_space<vmem>>, %arg6: memref<8x32xf32, #tpu.memory_space<vmem>>, %arg7: memref<8x32xf32, #tpu.memory_space<vmem>>, %arg8: memref<8x32xf32, #tpu.memory_space<vmem>>) attributes {dimension_semantics = [#tpu.dimension_semantics<parallel>, #tpu.dimension_semantics<parallel>, #tpu.dimension_semantics<arbitrary>], iteration_bounds = array<i64: 2, 1, 1>, scalar_prefetch = 0 : i64, scratch_operands = 1 : i64, tpu.core_type = #tpu.core_type<tc>, window_params = [{transform_indices = @transform_0, window_bounds = array<i64: 8, 32>}, {transform_indices = @transform_1, window_bounds = array<i64: 32, 32>}, {transform_indices = @transform_2, window_bounds = array<i64: 1, 32>}, {transform_indices = @transform_3, window_bounds = array<i64: 8, 32>}, {transform_indices = @transform_4, window_bounds = array<i64: 8, 32>}]} {
    %c0_i32 = arith.constant 0 : i32
    %0 = arith.cmpi eq, %arg2, %c0_i32 : i32
    %1 = arith.extui %0 : i1 to i32
    %c0_i32_0 = arith.constant 0 : i32
    %2 = arith.cmpi ne, %1, %c0_i32_0 : i32
    scf.if %2 {
      %c0_10 = arith.constant 0 : index
      %c0_11 = arith.constant 0 : index
      %12 = vector.load %arg6[%c0_10, %c0_11] : memref<8x32xf32, #tpu.memory_space<vmem>>, vector<8x32xf32>
      %c0_12 = arith.constant 0 : index
      %c0_13 = arith.constant 0 : index
      %13 = vector.load %arg5[%c0_12, %c0_13] : memref<1x32xf32, #tpu.memory_space<vmem>>, vector<1x32xf32>
      %14 = vector.broadcast %13 : vector<1x32xf32> to vector<8x32xf32>
      %15 = arith.addf %12, %14 : vector<8x32xf32>
      %c0_14 = arith.constant 0 : index
      %c0_15 = arith.constant 0 : index
      %16 = vector.load %arg8[%c0_14, %c0_15] : memref<8x32xf32, #tpu.memory_space<vmem>>, vector<8x32xf32>
      tpu.vector_store %arg8[%c0_14, %c0_15], %15 {strides = array<i32>} : memref<8x32xf32, #tpu.memory_space<vmem>>, vector<8x32xf32>,
    } else {
    }
    %c0 = arith.constant 0 : index
    %c0_1 = arith.constant 0 : index
    %3 = vector.load %arg8[%c0, %c0_1] : memref<8x32xf32, #tpu.memory_space<vmem>>, vector<8x32xf32>
    %c0_2 = arith.constant 0 : index
    %c0_3 = arith.constant 0 : index
    %4 = vector.load %arg3[%c0_2, %c0_3] : memref<8x32xbf16, #tpu.memory_space<vmem>>, vector<8x32xbf16>
    %c0_4 = arith.constant 0 : index
    %c0_5 = arith.constant 0 : index
    %5 = vector.load %arg4[%c0_4, %c0_5] : memref<32x32xbf16, #tpu.memory_space<vmem>>, vector<32x32xbf16>
    %cst = arith.constant dense<0.000000e+00> : vector<8x32xf32>
    %6 = tpu.matmul %4, %5, %cst {dimension_numbers = #tpu.dot_dimension_numbers<[1], [0], [0], [1], [0, 0, 1, 1], [], []>} : vector<8x32xbf16>, vector<32x32xbf16>, vector<8x32xf32> -> vector<8x32xf32>
    %7 = arith.addf %3, %6 : vector<8x32xf32>
    %c0_6 = arith.constant 0 : index
    %c0_7 = arith.constant 0 : index
    %8 = vector.load %arg8[%c0_6, %c0_7] : memref<8x32xf32, #tpu.memory_space<vmem>>, vector<8x32xf32>
    tpu.vector_store %arg8[%c0_6, %c0_7], %7 {strides = array<i32>} : memref<8x32xf32, #tpu.memory_space<vmem>>, vector<8x32xf32>,
    %c0_i32_8 = arith.constant 0 : i32
    %9 = arith.cmpi eq, %arg2, %c0_i32_8 : i32
    %10 = arith.extui %9 : i1 to i32
    %c0_i32_9 = arith.constant 0 : i32
    %11 = arith.cmpi ne, %10, %c0_i32_9 : i32
    scf.if %11 {
      %c0_10 = arith.constant 0 : index
      %c0_11 = arith.constant 0 : index
      %12 = vector.load %arg8[%c0_10, %c0_11] : memref<8x32xf32, #tpu.memory_space<vmem>>, vector<8x32xf32>
      %c0_12 = arith.constant 0 : index
      %c0_13 = arith.constant 0 : index
      %13 = vector.load %arg7[%c0_12, %c0_13] : memref<8x32xf32, #tpu.memory_space<vmem>>, vector<8x32xf32>
      tpu.vector_store %arg7[%c0_12, %c0_13], %12 {strides = array<i32>} : memref<8x32xf32, #tpu.memory_space<vmem>>, vector<8x32xf32>,
    } else {
    }
    return
  }
  func.func @transform_0(%arg0: i32, %arg1: i32, %arg2: i32) -> (i32, i32) {
    %c0_i32 = arith.constant 0 : i32
    return %arg0, %arg2 : i32, i32
  }
  func.func @transform_1(%arg0: i32, %arg1: i32, %arg2: i32) -> (i32, i32) {
    %c0_i32 = arith.constant 0 : i32
    return %arg2, %arg1 : i32, i32
  }
  func.func @transform_2(%arg0: i32, %arg1: i32, %arg2: i32) -> (i32, i32) {
    %c0_i32 = arith.constant 0 : i32
    %c0_i32_0 = arith.constant 0 : i32
    return %c0_i32, %arg1 : i32, i32
  }
  func.func @transform_3(%arg0: i32, %arg1: i32, %arg2: i32) -> (i32, i32) {
    %c0_i32 = arith.constant 0 : i32
    return %arg0, %arg1 : i32, i32
  }
  func.func @transform_4(%arg0: i32, %arg1: i32, %arg2: i32) -> (i32, i32) {
    %c0_i32 = arith.constant 0 : i32
    return %arg0, %arg1 : i32, i32
  }
}

</mosaic_0001>

<llo_original>
// kernel: _lambda_.1
$region0: #{_lambda_.1}
  #allocation0 [shape = 'u32[]', space=smem, size = 0x4, offset = 0x4, fixed_abs, tag = 'smem constant byte address 0x4 - core index']
  #allocation1 [shape = 'u32[144,128]{1,0:T(1,128)}', space=vmem, size = 0x12000, scoped, tag = 'internal scratch']
  #allocation2 [shape = 'f32[8,32]{1,0:T(8,128)}', space=vmem, size = 0x1000, scoped, tag = 'scratch operand']
  %s0 = inlined_call_operand.vmem [shape: bf16[16,32], index: 0, kind: input, shape index: {}]
  %s1 = inlined_call_operand.hbm [shape: bf16[32,32], index: 1, kind: input, shape index: {}]
  %s2 = inlined_call_operand.vmem [shape: f32[1,32], index: 2, kind: input, shape index: {}]
  %s3 = inlined_call_operand.vmem [shape: f32[16,32], index: 3, kind: input, shape index: {}]
  %s4 = inlined_call_operand.hbm [shape: f32[16,32], index: 4, kind: output, shape index: {}]
  %s5 = sld [smem:[#allocation0]]
  $region61: #{_lambda_.1} parent=0
    _
  %s7 = ssub.s32 1, %s5
  %s8 = scalar_select 0, %s7, %s5
  $region1: #{_lambda_.1} parent=0
    #allocation3 [shape = 'u8[8192]{0}', space=vmem, size = 0x2000, scoped, tag = 'input window, operand 1, single buffered']
    #allocation4 [shape = 's32[2]{0}', space=sflag, size = 0x8, scoped, tag = 'scoped memory for _lambda_.1']
    #allocation5 [shape = 's32[2]{0}', space=sflag, size = 0x8, scoped, tag = 'scoped memory for _lambda_.1']
    #allocation6 [shape = 'u8[8192]{0}', space=vmem, size = 0x2000, scoped, tag = 'output window, operand 0']
    %9 = vsyncpa [#allocation4], 0
    %10 = vsyncpa [#allocation5], 0
    %s11 = scalar_lea.sflag [#allocation5], 1
    %12 = vsyncpa %s11, 0
    loop: start=0, step=1, limit=4
    $region2: #{_lambda_.1} parent=1 // loop_pre_header
      _
    $region3: #{_lambda_.1} parent=1 // loop_header
      %s14 = sphi 0, %s18
      %p15 = scmp.ge.s32.totalorder %s14, 4
      %s21 = sphi 0, %s40
      %s22 = sphi 0, %s36
      %s23 = sphi 0, %s32
      %s24 = sphi 0, %s21
      %s25 = sphi 0, %s22
      %s26 = sphi 0, %s23
      %s27 = sphi 0, %s24
      %s28 = sphi 0, %s25
      %s29 = sphi 0, %s26
      %s45 = sphi 0, %s47
      %s48 = sphi 0, %s45
      %s49 = sphi 0, %s48
      %s65 = sphi 0, %s49
      %s73 = sphi 0, %s75
      %s76 = sphi 0, %s73
      %s77 = sphi 0, %s76
      %s93 = sphi 0, %s77
      %s99 = sphi 0, %s101
      %s102 = sphi 0, %s99
      %s103 = sphi 0, %s102
      %s119 = sphi 0, %s103
      %s127 = sphi 0, %s129
      %s130 = sphi 0, %s127
      %s131 = sphi 0, %s130
      %s147 = sphi 0, %s131
      %s155 = sphi 0, %s157
      %s158 = sphi 0, %s155
      %s159 = sphi 0, %s158
      %s175 = sphi 0, %s159
    $region4: #{_lambda_.1} parent=1 // loop_header_branch
      %17 = sbr.rel (%p15) target = $region8
    $region5: #{_lambda_.1} parent=1 // loop_body
      %s19 = ssub.s32 %s14, 1
      %s20 = ssub.s32 %s14, 2
      %s30 = sadd.s32 1, %s23
      %p31 = scmp.ge.s32.totalorder %s30, 1
      %s32 = scalar_select %p31, 0, %s30
      %s33 = sadd.s32 1, %s22
      %s34 = scalar_select %p31, %s33, %s22
      %p35 = scmp.ge.s32.totalorder %s34, 1
      %s36 = scalar_select %p35, 0, %s34
      %s37 = sadd.s32 1, %s21
      %s38 = scalar_select %p35, %s37, %s21
      %p39 = scmp.ge.s32.totalorder %s38, 2
      %s40 = scalar_select %p39, 0, %s38
      %s41 = ssub.s32 %s21, %s40
      %s42 = ssub.s32 %s23, %s32
      %s43 = sor.u32 %s41, %s42
      %p44 = scmp.eq.s32.totalorder %s43, 0
      %s46 = sadd.s32 %s45, 1
      %s47 = scalar_select %p44, %s45, %s46
      %p50 = pneg %p44
      %p51 = scmp.eq.s32.totalorder %s14, 1
      %p52 = por %p50, %p51
      %p53 = scmp.ne.s32.totalorder %s45, %s48
      %p54 = scmp.eq.s32.totalorder %s14, 0
      %p55 = por %p53, %p54
      %p56 = scmp.ne.s32.totalorder %s45, %s48
      %p57 = scmp.eq.s32.totalorder %s19, 1
      %p58 = por %p56, %p57
      %p59 = scmp.ne.s32.totalorder %s48, %s49
      %p60 = scmp.eq.s32.totalorder %s19, 0
      %p61 = por %p59, %p60
      %p62 = scmp.ne.s32.totalorder %s48, %s49
      %p63 = scmp.eq.s32.totalorder %s20, 1
      %p64 = por %p62, %p63
      %p66 = scmp.ne.s32.totalorder %s49, %s65
      %p67 = scmp.eq.s32.totalorder %s20, 0
      %p68 = por %p66, %p67
      %s69 = ssub.s32 %s23, %s32
      %s70 = ssub.s32 %s22, %s36
      %s71 = sor.u32 %s69, %s70
      %p72 = scmp.eq.s32.totalorder %s71, 0
      %s74 = sadd.s32 %s73, 1
      %s75 = scalar_select %p72, %s73, %s74
      %p78 = pneg %p72
      %p79 = scmp.eq.s32.totalorder %s14, 1
      %p80 = por %p78, %p79
      %p81 = scmp.ne.s32.totalorder %s73, %s76
      %p82 = scmp.eq.s32.totalorder %s14, 0
      %p83 = por %p81, %p82
      %p84 = scmp.ne.s32.totalorder %s73, %s76
      %p85 = scmp.eq.s32.totalorder %s19, 1
      %p86 = por %p84, %p85
      %p87 = scmp.ne.s32.totalorder %s76, %s77
      %p88 = scmp.eq.s32.totalorder %s19, 0
      %p89 = por %p87, %p88
      %p90 = scmp.ne.s32.totalorder %s76, %s77
      %p91 = scmp.eq.s32.totalorder %s20, 1
      %p92 = por %p90, %p91
      %p94 = scmp.ne.s32.totalorder %s77, %s93
      %p95 = scmp.eq.s32.totalorder %s20, 0
      %p96 = por %p94, %p95
      %s97 = ssub.s32 %s22, %s36
      %p98 = scmp.eq.s32.totalorder %s97, 0
      %s100 = sadd.s32 %s99, 1
      %s101 = scalar_select %p98, %s99, %s100
      %p104 = pneg %p98
      %p105 = scmp.eq.s32.totalorder %s14, 1
      %p106 = por %p104, %p105
      %p107 = scmp.ne.s32.totalorder %s99, %s102
      %p108 = scmp.eq.s32.totalorder %s14, 0
      %p109 = por %p107, %p108
      %p110 = scmp.ne.s32.totalorder %s99, %s102
      %p111 = scmp.eq.s32.totalorder %s19, 1
      %p112 = por %p110, %p111
      %p113 = scmp.ne.s32.totalorder %s102, %s103
      %p114 = scmp.eq.s32.totalorder %s19, 0
      %p115 = por %p113, %p114
      %p116 = scmp.ne.s32.totalorder %s102, %s103
      %p117 = scmp.eq.s32.totalorder %s20, 1
      %p118 = por %p116, %p117
      %p120 = scmp.ne.s32.totalorder %s103, %s119
      %p121 = scmp.eq.s32.totalorder %s20, 0
      %p122 = por %p120, %p121
      %s123 = ssub.s32 %s21, %s40
      %s124 = ssub.s32 %s22, %s36
      %s125 = sor.u32 %s123, %s124
      %p126 = scmp.eq.s32.totalorder %s125, 0
      %s128 = sadd.s32 %s127, 1
      %s129 = scalar_select %p126, %s127, %s128
      %p132 = pneg %p126
      %p133 = scmp.eq.s32.totalorder %s14, 1
      %p134 = por %p132, %p133
      %p135 = scmp.ne.s32.totalorder %s127, %s130
      %p136 = scmp.eq.s32.totalorder %s14, 0
      %p137 = por %p135, %p136
      %p138 = scmp.ne.s32.totalorder %s127, %s130
      %p139 = scmp.eq.s32.totalorder %s19, 1
      %p140 = por %p138, %p139
      %p141 = scmp.ne.s32.totalorder %s130, %s131
      %p142 = scmp.eq.s32.totalorder %s19, 0
      %p143 = por %p141, %p142
      %p144 = scmp.ne.s32.totalorder %s130, %s131
      %p145 = scmp.eq.s32.totalorder %s20, 1
      %p146 = por %p144, %p145
      %p148 = scmp.ne.s32.totalorder %s131, %s147
      %p149 = scmp.eq.s32.totalorder %s20, 0
      %p150 = por %p148, %p149
      %s151 = ssub.s32 %s21, %s40
      %s152 = ssub.s32 %s22, %s36
      %s153 = sor.u32 %s151, %s152
      %p154 = scmp.eq.s32.totalorder %s153, 0
      %s156 = sadd.s32 %s155, 1
      %s157 = scalar_select %p154, %s155, %s156
      %p160 = pneg %p154
      %p161 = scmp.eq.s32.totalorder %s14, 1
      %p162 = por %p160, %p161
      %p163 = scmp.ne.s32.totalorder %s155, %s158
      %p164 = scmp.eq.s32.totalorder %s14, 0
      %p165 = por %p163, %p164
      %p166 = scmp.ne.s32.totalorder %s155, %s158
      %p167 = scmp.eq.s32.totalorder %s19, 1
      %p168 = por %p166, %p167
      %p169 = scmp.ne.s32.totalorder %s158, %s159
      %p170 = scmp.eq.s32.totalorder %s19, 0
      %p171 = por %p169, %p170
      %p172 = scmp.ne.s32.totalorder %s158, %s159
      %p173 = scmp.eq.s32.totalorder %s20, 1
      %p174 = por %p172, %p173
      %p176 = scmp.ne.s32.totalorder %s159, %s175
      %p177 = scmp.eq.s32.totalorder %s20, 0
      %p178 = por %p176, %p177
      %p179 = scmp.le.s32.totalorder 1, %s14
      %p180 = scmp.lt.s32.totalorder %s14, 3
      %p181 = pnand %p179, %p180
      %p182 = pneg %p181
      // Predicated region
      $region9: #{_lambda_.1} parent=5 // pred_check
        _
      $region10: #{_lambda_.1} parent=5 // pred_check_branch
        %184 = sbr.rel (%p181) target = $region12
      $region11: #{_lambda_.1} parent=5 // pred_region
        %s185 = ssub.s32 %s14, 1
        // Predicated region
        $region13: #{_lambda_.1} parent=11 // pred_check
          %p186 = pneg %p89
        $region14: #{_lambda_.1} parent=11 // pred_check_branch
          %188 = sbr.rel (%p186) target = $region16
        $region15: #{_lambda_.1} parent=11 // pred_region
          %s189 = smul.u32 4, %s26
          %s191 = ssub.s32 256, 256
          %192 = vsyncadd [#allocation4], %s191
          %s193 = sadd.s32 %s25, %s189
          %s194 = smul.addr %s193, 64
          %s195 = scalar_lea.hbm %s1, %s194
          %s196 = sshll.u32 [#allocation3], 4
          %s197 = int_to_ptr.vmem [resolvable:$true] %s196
          %202 = dma.hbm_to_vmem [thread:$0]  %s195, 256, %s197, [#allocation4], 64, 64, 4
        $region16: #{_lambda_.1} parent=11 // pred_fallthru
          _
        // Predicated region
        $region17: #{_lambda_.1} parent=11 // pred_check
          %p203 = pneg %p115
        $region18: #{_lambda_.1} parent=11 // pred_check_branch
          %205 = sbr.rel (%p203) target = $region20
        $region19: #{_lambda_.1} parent=11 // pred_region
          %p206 = scmp.lt.s32.totalorder %s25, 0
          %s207 = scalar_select %p206, %s25, 0
          %s208 = scalar_lea.vmem %s2, %s207
        $region20: #{_lambda_.1} parent=11 // pred_fallthru
          _
      $region12: #{_lambda_.1} parent=5 // pred_fallthru
        _
      %p209 = scmp.lt.s32.totalorder %s14, 2
      // Predicated region
      $region21: #{_lambda_.1} parent=5 // pred_check
        %p210 = pneg %p209
      $region22: #{_lambda_.1} parent=5 // pred_check_branch
        %212 = sbr.rel (%p210) target = $region24
      $region23: #{_lambda_.1} parent=5 // pred_region
        // Predicated region
        $region25: #{_lambda_.1} parent=23 // pred_check
          %p213 = pneg %p55
        $region26: #{_lambda_.1} parent=23 // pred_check_branch
          %215 = sbr.rel (%p213) target = $region28
        $region27: #{_lambda_.1} parent=23 // pred_region
          %p216 = scmp.lt.s32.totalorder %s21, 1
          %s217 = scalar_select %p216, %s21, 1
          %p218 = scmp.lt.s32.totalorder %s23, 0
          %s219 = scalar_select %p218, %s23, 0
          %s220 = sadd.s32 %s219, %s217
          %s221 = smul.addr %s220, 4
          %s222 = scalar_lea.vmem %s0, %s221
        $region28: #{_lambda_.1} parent=23 // pred_fallthru
          _
        // Predicated region
        $region29: #{_lambda_.1} parent=23 // pred_check
          %p223 = pneg %p137
        $region30: #{_lambda_.1} parent=23 // pred_check_branch
          %225 = sbr.rel (%p223) target = $region32
        $region31: #{_lambda_.1} parent=23 // pred_region
          %p226 = scmp.lt.s32.totalorder %s21, 1
          %s227 = scalar_select %p226, %s21, 1
          %p228 = scmp.lt.s32.totalorder %s22, 0
          %s229 = scalar_select %p228, %s22, 0
          %s230 = sadd.s32 %s229, %s227
          %s231 = smul.addr %s230, 8
          %s232 = scalar_lea.vmem %s3, %s231
        $region32: #{_lambda_.1} parent=23 // pred_fallthru
          _
      $region24: #{_lambda_.1} parent=5 // pred_fallthru
        _
      %p233 = scmp.le.s32.totalorder 1, %s14
      %p234 = scmp.lt.s32.totalorder %s14, 3
      %p235 = pnand %p233, %p234
      %p236 = pneg %p235
      // Predicated region
      $region33: #{_lambda_.1} parent=5 // pred_check
        _
      $region34: #{_lambda_.1} parent=5 // pred_check_branch
        %238 = sbr.rel (%p235) target = $region36
      $region35: #{_lambda_.1} parent=5 // pred_region
        %s239 = ssub.s32 %s14, 1
        // Predicated region
        $region37: #{_lambda_.1} parent=35 // pred_check
          %p240 = pneg %p89
        $region38: #{_lambda_.1} parent=35 // pred_check_branch
          %242 = sbr.rel (%p240) target = $region40
        $region39: #{_lambda_.1} parent=35 // pred_region
          %243 = dma.done [#allocation4], 256
        $region40: #{_lambda_.1} parent=35 // pred_fallthru
          _
        %p244 = scmp.lt.s32.totalorder %s24, 1
        %s245 = scalar_select %p244, %s24, 1
        %p246 = scmp.lt.s32.totalorder %s26, 0
        %s247 = scalar_select %p246, %s26, 0
        %s248 = sadd.s32 %s247, %s245
        %s249 = smul.addr %s248, 4
        %s250 = scalar_lea.vmem %s0, %s249
        %p251 = pneg %p61
        %p252 = pneg %p58
        %p253 = pneg %p89
        %p254 = pneg %p86
        %p255 = scmp.lt.s32.totalorder %s25, 0
        %s256 = scalar_select %p255, %s25, 0
        %s257 = scalar_lea.vmem %s2, %s256
        %p258 = pneg %p115
        %p259 = pneg %p112
        %p260 = scmp.lt.s32.totalorder %s24, 1
        %s261 = scalar_select %p260, %s24, 1
        %p262 = scmp.lt.s32.totalorder %s25, 0
        %s263 = scalar_select %p262, %s25, 0
        %s264 = sadd.s32 %s263, %s261
        %s265 = smul.addr %s264, 8
        %s266 = scalar_lea.vmem %s3, %s265
        %p267 = pneg %p143
        %p268 = pneg %p140
        %p269 = pneg %p171
        %p270 = pneg %p168
        %s271 = sand.u32 %s158, 1
        %s272 = scalar_lea.sflag [#allocation5], %s271
        %s273 = sand.u32 %s158, 1
        %s274 = smul.addr %s273, 8
        %s275 = scalar_lea.vmem [#allocation6], %s274
        %p276 = scmp.lt.s32.totalorder %s24, 1
        %s277 = scalar_select %p276, %s24, 1
        %p278 = scmp.lt.s32.totalorder %s26, 0
        %s279 = scalar_select %p278, %s26, 0
        %s280 = sadd.s32 %s279, %s277
        %s281 = smul.addr %s280, 4
        %s282 = scalar_lea.vmem %s0, %s281
        %s283 = smul.u32 4, %s26
        %p284 = scmp.lt.s32.totalorder %s25, 0
        %s285 = scalar_select %p284, %s25, 0
        %s286 = scalar_lea.vmem %s2, %s285
        %p287 = scmp.lt.s32.totalorder %s24, 1
        %s288 = scalar_select %p287, %s24, 1
        %p289 = scmp.lt.s32.totalorder %s25, 0
        %s290 = scalar_select %p289, %s25, 0
        %s291 = sadd.s32 %s290, %s288
        %s292 = smul.addr %s291, 8
        %s293 = scalar_lea.vmem %s3, %s292
        %p295 = scmp.eq.s32.totalorder %s26, 0
        // Predicated region
        $region41: #{_lambda_.1} parent=35 // pred_check
          %p296 = pneg %p295
        $region42: #{_lambda_.1} parent=35 // pred_check_branch
          %298 = sbr.rel (%p296) target = $region44
        $region43: #{_lambda_.1} parent=35 // pred_region
          %v299 = vld [vmem:[%s293] sm:$0xff]
          %v300 = vld [vmem:[%s286] sm:$0x1]
          %v302 = vlaneseq
          %v303 = vshrl.u32 %v302, 7
          %v304 = vsub.s32 0, %v303
          %v305 = vrot.slane %v300, %v304
          %v307 = vadd.f32 %v299, %v305
          %vm308 = vcmask 261120
          %309 = vst.msk [vmem:[#allocation2] sm:$0xff] %vm308, %v307
        $region44: #{_lambda_.1} parent=35 // pred_fallthru
          _
        %v310 = vld [vmem:[#allocation2] sm:$0xff]
        %v311 = vld [vmem:[%s282] sm:$0xf]
        %v312 = vld [vmem:[#allocation3] sm:$0xf]
        %v313 = vld [vmem:[#allocation3 + $0x4] sm:$0xf]
        %v314 = vld [vmem:[#allocation3 + $0x8] sm:$0xf]
        %v315 = vld [vmem:[#allocation3 + $0xc] sm:$0xf]
        %v320 = vunpack.c.l.b16 %v312
        %v321 = vunpack.c.l.b16 %v313
        %v322 = vunpack.c.l.b16 %v314
        %v323 = vunpack.c.l.b16 %v315
        %v324 = vpack.c.b16 %v321, %v320
        %v325 = vpack.c.b16 %v323, %v322
        %vm328 = vcmask 261120
        %v330 = vsel %vm328, %v311, 0
        %332 = vmatprep.subr.bf16.mxu0 0
        %333 = vmatpush1.bf16.msra.mxu0 0
        %334 = vmatprep.subr.bf16.mxu0 0
        %335 = vmatpush1.bf16.msra.mxu0 0
        %336 = vmatprep.subr.bf16.mxu0 0
        %337 = vmatpush1.bf16.msra.mxu0 0
        %338 = vmatprep.subr.bf16.mxu0 0
        %339 = vmatpush1.bf16.msra.mxu0 0
        %340 = vmatprep.subr.bf16.mxu0 0
        %341 = vmatpush1.bf16.msra.mxu0 0
        %342 = vmatprep.subr.bf16.mxu0 0
        %343 = vmatpush1.bf16.msra.mxu0 0
        %344 = vmatprep.subr.bf16.mxu0 0
        %345 = vmatpush1.bf16.msra.mxu0 %v325
        %346 = vmatprep.subr.bf16.mxu0 0
        %347 = vmatpush1.bf16.msra.mxu0 %v324
        %348 = vmatprep.subr.bf16.mxu0 0
        %349 = vmatpush2.bf16.msra.mxu0 0
        %350 = vmatprep.subr.bf16.mxu0 0
        %351 = vmatpush2.bf16.msra.mxu0 0
        %352 = vmatprep.subr.bf16.mxu0 0
        %353 = vmatpush2.bf16.msra.mxu0 0
        %354 = vmatprep.subr.bf16.mxu0 0
        %355 = vmatpush2.bf16.msra.mxu0 0
        %356 = vmatprep.subr.bf16.mxu0 0
        %357 = vmatpush2.bf16.msra.mxu0 0
        %358 = vmatprep.subr.bf16.mxu0 0
        %359 = vmatpush2.bf16.msra.mxu0 0
        %360 = vmatprep.subr.bf16.mxu0 0
        %361 = vmatpush2.bf16.msra.mxu0 0
        %362 = vmatprep.subr.bf16.mxu0 0
        %363 = vmatpush2.bf16.msra.mxu0 0
        %364 = vmatprep.mubr.bf16.mxu0 0
        %365 = vmatmul.mubr.bf16.gmra.mxu0 %v330
        %v366 = vpop.f32.mrf.mxu0
        %v367 = vadd.f32 0.0, %v366
        %v368 = vpop.f32.mrf.mxu0
        %v369 = vpop.f32.mrf.mxu0
        %v370 = vpop.f32.mrf.mxu0
        %371 = vdwg.mxu0
        %v372 = vadd.f32 %v310, %v367
        %373 = vst.msk [vmem:[#allocation2] sm:$0xff] %vm328, %v372
        // Predicated region
        $region45: #{_lambda_.1} parent=35 // pred_check
          %p374 = pneg %p295
        $region46: #{_lambda_.1} parent=35 // pred_check_branch
          %376 = sbr.rel (%p374) target = $region48
        $region47: #{_lambda_.1} parent=35 // pred_region
          %v377 = vld [vmem:[#allocation2] sm:$0xff]
          %378 = vst.msk [vmem:[%s275] sm:$0xff] %vm328, %v377
        $region48: #{_lambda_.1} parent=35 // pred_fallthru
          _
        %s379 = sand.u32 %s158, 1
        %s380 = scalar_lea.sflag [#allocation5], %s379
        %s381 = sand.u32 %s158, 1
        %s382 = smul.addr %s381, 8
        %s383 = scalar_lea.vmem [#allocation6], %s382
        // Predicated region
        $region49: #{_lambda_.1} parent=35 // pred_check
          %p384 = pneg %p168
        $region50: #{_lambda_.1} parent=35 // pred_check_branch
          %386 = sbr.rel (%p384) target = $region52
        $region51: #{_lambda_.1} parent=35 // pred_region
          %s388 = ssub.s32 128, 128
          %389 = vsyncadd %s380, %s388
          %s390 = sadd.s32 %s25, %s24
          %s391 = smul.addr %s390, 128
          %s392 = scalar_lea.hbm %s4, %s391
          %s394 = sshll.u32 %s383, 4
          %s395 = int_to_ptr.vmem [resolvable:$true] %s394
          %397 = dma.vmem_to_hbm [thread:$0]  %s395, 128, %s392, %s380
        $region52: #{_lambda_.1} parent=35 // pred_fallthru
          _
      $region36: #{_lambda_.1} parent=5 // pred_fallthru
        _
      %p398 = scmp.le.s32.totalorder 2, %s14
      // Predicated region
      $region53: #{_lambda_.1} parent=5 // pred_check
        %p399 = pneg %p398
      $region54: #{_lambda_.1} parent=5 // pred_check_branch
        %401 = sbr.rel (%p399) target = $region56
      $region55: #{_lambda_.1} parent=5 // pred_region
        %s402 = ssub.s32 %s14, 2
        // Predicated region
        $region57: #{_lambda_.1} parent=55 // pred_check
          %p403 = pneg %p174
        $region58: #{_lambda_.1} parent=55 // pred_check_branch
          %405 = sbr.rel (%p403) target = $region60
        $region59: #{_lambda_.1} parent=55 // pred_region
          %s406 = sand.u32 %s159, 1
          %s407 = scalar_lea.sflag [#allocation5], %s406
          %s408 = sand.u32 %s159, 1
          %s409 = smul.addr %s408, 8
          %s410 = scalar_lea.vmem [#allocation6], %s409
          %411 = dma.done %s407, 128
        $region60: #{_lambda_.1} parent=55 // pred_fallthru
          _
      $region56: #{_lambda_.1} parent=5 // pred_fallthru
        _
    $region6: #{_lambda_.1} parent=1 // loop_footer
      %s18 = sadd.s32 1, %s14
    $region7: #{_lambda_.1} parent=1 // loop_footer_branch
      %13 = sbr.rel target = $region3
    $region8: #{_lambda_.1} parent=1 // loop_exit
      _
    %412 = vsyncpa [#allocation4], 1
    %s413 = scalar_lea.sflag [#allocation4], 1
    %414 = vsyncpa %s413, 1
    %415 = vsyncpa [#allocation5], 1
    %s416 = scalar_lea.sflag [#allocation5], 1
    %417 = vsyncpa %s416, 1

</llo_original>
